<compile_context>
chip_gen: v6e
topology: v6e:2x2x1
jax: 0.10.0
libtpu: 0.0.40
codegen_flags: <defaults>
</compile_context>

<pallas_src>
import functools

import jax
import jax.numpy as jnp
import numpy as np
from jax.experimental import pallas as pl
from jax.experimental.pallas import tpu as pltpu


def _round_up(x, m):
    return (x + m - 1) // m * m


def _threefry2x32_bits(k0, k1, c0, c1):
    """Threefry-2x32 (20 rounds) on uint32 counters.

    Uses only add/xor/shift/or on uint32, so it lowers on TPU Mosaic and in
    interpret mode alike.  (c0, c1) is the per-element counter, (k0, k1) the key.
    """
    def rotl(x, r):
        return (x << jnp.uint32(r)) | (x >> jnp.uint32(32 - r))

    rots = ((13, 15, 26, 6), (17, 29, 16, 24))
    k2 = k0 ^ k1 ^ jnp.uint32(0x1BD11BDA)
    ks = (k0, k1, k2)
    x0 = c0 + k0
    x1 = c1 + k1
    for d in range(5):
        for r in rots[d % 2]:
            x0 = x0 + x1
            x1 = rotl(x1, r)
            x1 = x1 ^ x0
        x0 = x0 + ks[(d + 1) % 3]
        x1 = x1 + ks[(d + 2) % 3] + jnp.uint32(d + 1)
    return x0 ^ x1


def _embedding_kernel(seed_ref, ids_ref, table_ref, out_ref, *,
                      dropout_rate, training):
    """One grid step = one tile of T tokens.

    seed_ref:  (1,)        int32   (SMEM, scalar prefetch)
    ids_ref:   (T, 1)      int32   token ids for this tile
    table_ref: (Vpad, D)   float32 full padded embedding table, VMEM-resident
    out_ref:   (T, D)      float32 gathered (+dropout) embeddings
    """
    tile, dim = out_ref.shape
    vpad = table_ref.shape[0]

    ids = ids_ref[...]                                             # (T, 1)
    # One-hot gather on the MXU: (T, Vpad) @ (Vpad, D) -> (T, D).  Exact,
    # since each output row is 1.0 * table[id] + zeros.
    vocab_iota = jax.lax.broadcasted_iota(jnp.int32, (tile, vpad), 1)
    one_hot = jnp.where(vocab_iota == ids, 1.0, 0.0).astype(table_ref.dtype)
    gathered = jnp.dot(one_hot, table_ref[...],
                       preferred_element_type=jnp.float32)         # (T, D)

    if training and dropout_rate >= 1.0:
        # torch.nn.Dropout(p=1.0) zeroes everything.
        out_ref[...] = jnp.zeros_like(out_ref)
    elif training and dropout_rate > 0.0:
        # Per-tile counter-based PRNG: counters are the global (row, col)
        # element coordinates, so every element gets an independent draw from
        # a single seed-keyed stream regardless of tiling.
        row = (pl.program_id(0) * tile
               + jax.lax.broadcasted_iota(jnp.int32, (tile, dim), 0))
        col = jax.lax.broadcasted_iota(jnp.int32, (tile, dim), 1)
        k0 = seed_ref[0].astype(jnp.uint32)
        k1 = jnp.uint32(0x9E3779B9)
        bits = _threefry2x32_bits(k0, k1, row.astype(jnp.uint32),
                                  col.astype(jnp.uint32))
        # Top 24 bits -> uniform in [0, 1); drop iff u < p  (bias <= 2^-24).
        u = ((bits >> jnp.uint32(8)).astype(jnp.int32).astype(jnp.float32)
             * jnp.float32(1.0 / (1 << 24)))
        keep = u >= jnp.float32(dropout_rate)
        scale = jnp.float32(1.0 / (1.0 - dropout_rate))
        out_ref[...] = jnp.where(keep, gathered * scale,
                                 jnp.zeros_like(gathered)).astype(out_ref.dtype)
    else:
        out_ref[...] = gathered.astype(out_ref.dtype)


def embedding_layer(token_ids, embedding_table, *, dropout_rate=0.0,
                    training=False, seed=0, tile_tokens=512):
    """Pallas implementation of EmbeddingLayer.forward.

    token_ids:       (B, S) int32
    embedding_table: (V, D) float32
    returns:         (B, S, D) float32
    """
    B, S = token_ids.shape
    V, D = embedding_table.shape
    n_tok = B * S

    # Tokens per grid step: multiple of 8, capped by the (padded) problem size.
    tile = min(int(tile_tokens), _round_up(n_tok, 8))
    tile = max(8, _round_up(tile, 8))
    n_tok_pad = _round_up(n_tok, tile)
    n_tiles = n_tok_pad // tile

    ids_flat = token_ids.reshape(n_tok).astype(jnp.int32)
    ids_pad = jnp.pad(ids_flat, (0, n_tok_pad - n_tok))      # pad id 0 (valid)
    ids2d = ids_pad.reshape(n_tok_pad, 1)

    # Pad vocab to a multiple of 128 so the one-hot contraction is MXU-aligned.
    v_pad = _round_up(V, 128)
    table_pad = jnp.pad(embedding_table, ((0, v_pad - V), (0, 0)))

    seed_arr = jnp.asarray([seed], dtype=jnp.int32)

    kernel = functools.partial(_embedding_kernel,
                               dropout_rate=float(dropout_rate),
                               training=bool(training))

    grid_spec = pltpu.PrefetchScalarGridSpec(
        num_scalar_prefetch=1,                      # seed -> SMEM
        grid=(n_tiles,),
        in_specs=[
            pl.BlockSpec((tile, 1), lambda i, seed_ref: (i, 0)),   # token ids
            pl.BlockSpec((v_pad, D), lambda i, seed_ref: (0, 0)),  # resident table
        ],
        out_specs=pl.BlockSpec((tile, D), lambda i, seed_ref: (i, 0)),
    )

    out_flat = pl.pallas_call(
        kernel,
        out_shape=jax.ShapeDtypeStruct((n_tok_pad, D), embedding_table.dtype),
        grid_spec=grid_spec,
        compiler_params=pltpu.CompilerParams(
            dimension_semantics=("parallel",)),
    )(seed_arr, ids2d, table_pad)

    return out_flat[:n_tok].reshape(B, S, D)


if __name__ == "__main__":
    # Small, deterministic setup consistent with the module's __init__:
    #   input_dim (embedding dim) = 32, full_dict_size (vocab) = 50, p = 0.2
    B, S = 2, 8
    V, D = 50, 32
    dropout_p = 0.2

    key = jax.random.PRNGKey(0)
    k_emb, k_ids = jax.random.split(key)

    # nn.Embedding default init: N(0, 1)
    embedding_table = jax.random.normal(k_emb, (V, D), dtype=jnp.float32)
    token_ids = jax.random.randint(k_ids, (B, S), 0, V, dtype=jnp.int32)

    # Eval-mode forward (dropout = identity) — check against a pure-JAX ref.
    out_eval = embedding_layer(token_ids, embedding_table,
                               dropout_rate=dropout_p, training=False)
    out_eval = jax.block_until_ready(out_eval)
    ref = jnp.take(embedding_table, token_ids.reshape(-1), axis=0).reshape(B, S, D)
    assert out_eval.shape == (B, S, D)
    np.testing.assert_allclose(np.asarray(out_eval), np.asarray(ref),
                               rtol=1e-6, atol=1e-6)

    # Training-mode forward (in-kernel inverted dropout, portable PRNG).
    out_train = embedding_layer(token_ids, embedding_table,
                                dropout_rate=dropout_p, training=True, seed=123)
    out_train = jax.block_until_ready(out_train)
    assert out_train.shape == (B, S, D)
    ot = np.asarray(out_train)
    scaled_ref = np.asarray(ref) / (1.0 - dropout_p)
    # Each element is either dropped (exact 0) or equals embedding / (1 - p).
    ok = np.isclose(ot, 0.0, atol=0.0) | np.isclose(ot, scaled_ref,
                                                    rtol=1e-5, atol=1e-6)
    assert np.all(ok)
    drop_frac = float(np.mean(ot == 0.0))
    assert 0.02 < drop_frac < 0.6, f"suspicious drop fraction {drop_frac}"

    print("KERNEL_OK")
</pallas_src>

<mosaic_0001>
module attributes {stable_mosaic.version = 11 : i64} {
  func.func @_embedding_kernel(%arg0: i32, %arg1: memref<1xi32, #tpu.memory_space<smem>>, %arg2: memref<16x1xi32, #tpu.memory_space<vmem>>, %arg3: memref<128x32xf32, #tpu.memory_space<vmem>>, %arg4: memref<16x32xf32, #tpu.memory_space<vmem>>) attributes {dimension_semantics = [#tpu.dimension_semantics<parallel>], iteration_bounds = array<i64: 1>, scalar_prefetch = 1 : i64, scratch_operands = 0 : i64, tpu.core_type = #tpu.core_type<tc>, window_params = [{transform_indices = @transform_0, window_bounds = array<i64: 16, 1>}, {pipeline_mode = #tpu.pipeline_mode<synchronous>, transform_indices = @transform_1, window_bounds = array<i64: 128, 32>}, {transform_indices = @transform_2, window_bounds = array<i64: 16, 32>}]} {
    %c0 = arith.constant 0 : index
    %c0_0 = arith.constant 0 : index
    %0 = vector.load %arg2[%c0, %c0_0] : memref<16x1xi32, #tpu.memory_space<vmem>>, vector<16x1xi32>
    %1 = tpu.iota {dimensions = array<i32: 1>} : vector<16x128xi32>
    %2 = vector.broadcast %0 : vector<16x1xi32> to vector<16x128xi32>
    %3 = arith.cmpi eq, %1, %2 : vector<16x128xi32>
    %cst = arith.constant 1.000000e+00 : f32
    %cst_1 = arith.constant 0.000000e+00 : f32
    %4 = vector.broadcast %cst : f32 to vector<16x128xf32>
    %5 = vector.broadcast %cst_1 : f32 to vector<16x128xf32>
    %6 = arith.select %3, %4, %5 : vector<16x128xi1>, vector<16x128xf32>
    %c0_2 = arith.constant 0 : index
    %c0_3 = arith.constant 0 : index
    %7 = vector.load %arg3[%c0_2, %c0_3] : memref<128x32xf32, #tpu.memory_space<vmem>>, vector<128x32xf32>
    %cst_4 = arith.constant dense<0.000000e+00> : vector<16x32xf32>
    %8 = tpu.matmul %6, %7, %cst_4 {dimension_numbers = #tpu.dot_dimension_numbers<[1], [0], [0], [1], [0, 0, 1, 1], [], []>} : vector<16x128xf32>, vector<128x32xf32>, vector<16x32xf32> -> vector<16x32xf32>
    %c0_5 = arith.constant 0 : index
    %c0_6 = arith.constant 0 : index
    %9 = vector.load %arg4[%c0_5, %c0_6] : memref<16x32xf32, #tpu.memory_space<vmem>>, vector<16x32xf32>
    tpu.vector_store %arg4[%c0_5, %c0_6], %8 {strides = array<i32>} : memref<16x32xf32, #tpu.memory_space<vmem>>, vector<16x32xf32>,
    return
  }
  func.func @transform_0(%arg0: i32, %arg1: memref<1xi32, #tpu.memory_space<smem>>) -> (i32, i32) {
    %c0_i32 = arith.constant 0 : i32
    %c0_i32_0 = arith.constant 0 : i32
    return %arg0, %c0_i32 : i32, i32
  }
  func.func @transform_1(%arg0: i32, %arg1: memref<1xi32, #tpu.memory_space<smem>>) -> (i32, i32) {
    %c0_i32 = arith.constant 0 : i32
    %c0_i32_0 = arith.constant 0 : i32
    %c0_i32_1 = arith.constant 0 : i32
    return %c0_i32, %c0_i32_0 : i32, i32
  }
  func.func @transform_2(%arg0: i32, %arg1: memref<1xi32, #tpu.memory_space<smem>>) -> (i32, i32) {
    %c0_i32 = arith.constant 0 : i32
    %c0_i32_0 = arith.constant 0 : i32
    return %arg0, %c0_i32 : i32, i32
  }
}

</mosaic_0001>

<llo_original>
// kernel: tpu_custom_call.1
$region0: #{tpu_custom_call.1}
  #allocation0 [shape = 'u32[]', space=smem, size = 0x4, offset = 0x4, fixed_abs, tag = 'smem constant byte address 0x4 - core index']
  #allocation1 [shape = 'u32[144,128]{1,0:T(1,128)}', space=vmem, size = 0x12000, scoped, tag = 'internal scratch']
  #allocation2 [shape = 's32[1]{0}', space=sflag, size = 0x4, scoped, tag = 'scoped memory for tpu_custom_call.1']
  #allocation3 [shape = 's32[1]{0:T(128)S(6)}', space=smem, size = 0x200, scoped, tag = 'prefetched SMEM operand 0']
  %s0 = inlined_call_operand.<no memory space> [shape: s32[1], index: 0, kind: input, shape index: {}]
  %s1 = inlined_call_operand.vmem [shape: s32[16,1], index: 1, kind: input, shape index: {}]
  %s2 = inlined_call_operand.vmem [shape: f32[128,32], index: 2, kind: input, shape index: {}]
  %s3 = inlined_call_operand.hbm [shape: f32[16,32], index: 3, kind: output, shape index: {}]
  %s4 = sld [smem:[#allocation0]]
  $region18: #{tpu_custom_call.1} parent=0
    _
  %s6 = ssub.s32 1, %s4
  %s7 = scalar_select 0, %s6, %s4
  %8 = sst [smem:[#allocation3]] %s0
  $region1: #{tpu_custom_call.1} parent=0
    #allocation4 [shape = 'u8[8192]{0}', space=vmem, size = 0x2000, scoped, tag = 'output window, operand 0, single buffered']
    #allocation5 [shape = 's32[1]{0}', space=sflag, size = 0x4, scoped, tag = 'scoped memory for tpu_custom_call.1']
    %9 = vsyncpa [#allocation5], 0
    // Predicated region
    $region2: #{tpu_custom_call.1} parent=1 // pred_check
      _
    $region3: #{tpu_custom_call.1} parent=1 // pred_check_branch
      %11 = sbr.rel (0) target = $region5
    $region4: #{tpu_custom_call.1} parent=1 // pred_region
      _
    $region5: #{tpu_custom_call.1} parent=1 // pred_fallthru
      _
    // Predicated region
    $region6: #{tpu_custom_call.1} parent=1 // pred_check
      _
    $region7: #{tpu_custom_call.1} parent=1 // pred_check_branch
      %13 = sbr.rel (0) target = $region9
    $region8: #{tpu_custom_call.1} parent=1 // pred_region
      _
    $region9: #{tpu_custom_call.1} parent=1 // pred_fallthru
      _
    %v14 = vld [vmem:[%s1] sm:$0xff]
    %v15 = vld [vmem:[%s1 + $0x8] sm:$0xff]
    %v16 = vlaneseq
    %v17 = vand.u32 %v16, 127
    %18 = vset.pattern.permute.xlu0 0
    %19 = vperm.xlu0 %18, %v14
    %v20 = vpop.permute.xlu0 %19
    %21 = vset.pattern.permute.xlu0 0
    %22 = vperm.xlu0 %21, %v15
    %v23 = vpop.permute.xlu0 %22
    %vm24 = vcmp.eq.s32.totalorder %v17, %v20
    %vm25 = vcmp.eq.s32.totalorder %v17, %v23
    %v26 = vsel %vm24, 1.0, 0.0
    %v27 = vsel %vm25, 1.0, 0.0
    %v28 = vld [vmem:[%s2] sm:$0xff]
    %v29 = vld [vmem:[%s2 + $0x8] sm:$0xff]
    %v30 = vld [vmem:[%s2 + $0x10] sm:$0xff]
    %v31 = vld [vmem:[%s2 + $0x18] sm:$0xff]
    %v32 = vld [vmem:[%s2 + $0x20] sm:$0xff]
    %v33 = vld [vmem:[%s2 + $0x28] sm:$0xff]
    %v34 = vld [vmem:[%s2 + $0x30] sm:$0xff]
    %v35 = vld [vmem:[%s2 + $0x38] sm:$0xff]
    %v36 = vld [vmem:[%s2 + $0x40] sm:$0xff]
    %v37 = vld [vmem:[%s2 + $0x48] sm:$0xff]
    %v38 = vld [vmem:[%s2 + $0x50] sm:$0xff]
    %v39 = vld [vmem:[%s2 + $0x58] sm:$0xff]
    %v40 = vld [vmem:[%s2 + $0x60] sm:$0xff]
    %v41 = vld [vmem:[%s2 + $0x68] sm:$0xff]
    %v42 = vld [vmem:[%s2 + $0x70] sm:$0xff]
    %v43 = vld [vmem:[%s2 + $0x78] sm:$0xff]
    %44 = vmatprep.subr.mxu0 0.0
    %45 = vmatpush1.msra.mxu0 %v43
    %46 = vmatprep.subr.mxu0 0.0
    %47 = vmatpush1.msra.mxu0 %v42
    %48 = vmatprep.subr.mxu0 0.0
    %49 = vmatpush1.msra.mxu0 %v41
    %50 = vmatprep.subr.mxu0 0.0
    %51 = vmatpush1.msra.mxu0 %v40
    %52 = vmatprep.subr.mxu0 0.0
    %53 = vmatpush1.msra.mxu0 %v39
    %54 = vmatprep.subr.mxu0 0.0
    %55 = vmatpush1.msra.mxu0 %v38
    %56 = vmatprep.subr.mxu0 0.0
    %57 = vmatpush1.msra.mxu0 %v37
    %58 = vmatprep.subr.mxu0 0.0
    %59 = vmatpush1.msra.mxu0 %v36
    %60 = vmatprep.subr.mxu0 0.0
    %61 = vmatpush1.msra.mxu0 %v35
    %62 = vmatprep.subr.mxu0 0.0
    %63 = vmatpush1.msra.mxu0 %v34
    %64 = vmatprep.subr.mxu0 0.0
    %65 = vmatpush1.msra.mxu0 %v33
    %66 = vmatprep.subr.mxu0 0.0
    %67 = vmatpush1.msra.mxu0 %v32
    %68 = vmatprep.subr.mxu0 0.0
    %69 = vmatpush1.msra.mxu0 %v31
    %70 = vmatprep.subr.mxu0 0.0
    %71 = vmatpush1.msra.mxu0 %v30
    %72 = vmatprep.subr.mxu0 0.0
    %73 = vmatpush1.msra.mxu0 %v29
    %74 = vmatprep.subr.mxu0 0.0
    %75 = vmatpush1.msra.mxu0 %v28
    %76 = vmatprep.subr.mxu0 0.0
    %77 = vmatpush2.msra.mxu0 0.0
    %78 = vmatprep.subr.mxu0 0.0
    %79 = vmatpush2.msra.mxu0 0.0
    %80 = vmatprep.subr.mxu0 0.0
    %81 = vmatpush2.msra.mxu0 0.0
    %82 = vmatprep.subr.mxu0 0.0
    %83 = vmatpush2.msra.mxu0 0.0
    %84 = vmatprep.subr.mxu0 0.0
    %85 = vmatpush2.msra.mxu0 0.0
    %86 = vmatprep.subr.mxu0 0.0
    %87 = vmatpush2.msra.mxu0 0.0
    %88 = vmatprep.subr.mxu0 0.0
    %89 = vmatpush2.msra.mxu0 0.0
    %90 = vmatprep.subr.mxu0 0.0
    %91 = vmatpush2.msra.mxu0 0.0
    %92 = vmatprep.subr.mxu0 0.0
    %93 = vmatpush2.msra.mxu0 0.0
    %94 = vmatprep.subr.mxu0 0.0
    %95 = vmatpush2.msra.mxu0 0.0
    %96 = vmatprep.subr.mxu0 0.0
    %97 = vmatpush2.msra.mxu0 0.0
    %98 = vmatprep.subr.mxu0 0.0
    %99 = vmatpush2.msra.mxu0 0.0
    %100 = vmatprep.subr.mxu0 0.0
    %101 = vmatpush2.msra.mxu0 0.0
    %102 = vmatprep.subr.mxu0 0.0
    %103 = vmatpush2.msra.mxu0 0.0
    %104 = vmatprep.subr.mxu0 0.0
    %105 = vmatpush2.msra.mxu0 0.0
    %106 = vmatprep.subr.mxu0 0.0
    %107 = vmatpush2.msra.mxu0 0.0
    %108 = vmatprep.mubr.f32.mxu0 0.0
    %109 = vmatmul.mubr.f32.gmra.mxu0 %v26
    %v110 = vpop.f32.mrf.mxu0
    %v111 = vadd.f32 0.0, %v110
    %v112 = vpop.f32.mrf.mxu0
    %113 = vmatprep.mubr.f32.mxu0 0.0
    %114 = vmatmul.mubr.f32.gmra.mxu0 %v27
    %v115 = vpop.f32.mrf.mxu0
    %v116 = vadd.f32 0.0, %v115
    %v117 = vpop.f32.mrf.mxu0
    %118 = vdwg.mxu0
    %vm119 = vcmask 261120
    %120 = vst.msk [vmem:[#allocation4] sm:$0xff] %vm119, %v111
    %121 = vst.msk [vmem:[#allocation4 + $0x8] sm:$0xff] %vm119, %v116
    // Predicated region
    $region10: #{tpu_custom_call.1} parent=1 // pred_check
      _
    $region11: #{tpu_custom_call.1} parent=1 // pred_check_branch
      %123 = sbr.rel (0) target = $region13
    $region12: #{tpu_custom_call.1} parent=1 // pred_region
      %s125 = ssub.s32 256, 256
      %126 = vsyncadd [#allocation5], %s125
      %s127 = sshll.u32 [#allocation4], 4
      %s128 = int_to_ptr.vmem [resolvable:$true] %s127
      %133 = dma.vmem_to_hbm [thread:$0]  %s128, 256, %s3, [#allocation5], 128, 128, 8
    $region13: #{tpu_custom_call.1} parent=1 // pred_fallthru
      _
    // Predicated region
    $region14: #{tpu_custom_call.1} parent=1 // pred_check
      _
    $region15: #{tpu_custom_call.1} parent=1 // pred_check_branch
      %135 = sbr.rel (0) target = $region17
    $region16: #{tpu_custom_call.1} parent=1 // pred_region
      %136 = dma.done [#allocation5], 256
    $region17: #{tpu_custom_call.1} parent=1 // pred_fallthru
      _
    %137 = vsyncpa [#allocation5], 1

</llo_original>
